<compile_context>
chip_gen: v5e
topology: v5e:2x2
jax: 0.10.0
libtpu: 0.0.40
codegen_flags: <defaults>
</compile_context>

<pallas_src>
import jax
import jax.numpy as jnp
from jax.experimental import pallas as pl
from jax.experimental.pallas import tpu as pltpu


def _pos_emb_kernel(x_ref, pos_ref, o_ref):
    # x_ref/o_ref: (TB, TL) tile; pos_ref: (1, TL) tile -> sublane broadcast add.
    # No upcasting: compute stays in the input dtype (bf16 stays bf16).
    o_ref[...] = x_ref[...] + pos_ref[...]


def _pick_tiles(B, L, itemsize, target_block_bytes):
    """Pick (TB, TL) block shape for the flattened (B, L) layout.

    TL is a multiple of 128 that divides L (else full L -- block == array dim
    is always legal).  TB divides B and is a multiple of 8 (sublane rule) or
    equals B.  Block footprint targets ~target_block_bytes.
    """
    # Batch-tile candidates: multiples of 8 dividing B, plus full B.
    tb_cands = [d for d in range(8, B, 8) if B % d == 0] + [B]
    min_tb = min(tb_cands)

    # Lane tile sized so a min_tb-row block stays within the target.
    max_tl_elems = max(128, target_block_bytes // (min_tb * itemsize))
    tl = L  # fallback: full extent (always legal)
    if L > max_tl_elems:
        t = (max_tl_elems // 128) * 128
        while t >= 128:
            if L % t == 0:
                tl = t
                break
            t -= 128

    # Grow the batch tile as far as the target allows.
    fitting = [d for d in tb_cands if d * tl * itemsize <= target_block_bytes]
    tb = max(fitting) if fitting else min_tb
    return tb, tl


def positional_embedding_1d(
    x: jax.Array,
    pos_embedding: jax.Array,
    *,
    target_block_bytes: int = 2 * 1024 * 1024,
) -> jax.Array:
    """x: (B, S, D), pos_embedding: (1, S, D) -> (B, S, D) = x + pos."""
    B, S, D = x.shape
    assert pos_embedding.shape == (1, S, D)
    assert x.dtype == pos_embedding.dtype, "dtypes of x and pos_embedding must match"

    L = S * D
    itemsize = jnp.dtype(x.dtype).itemsize

    # Lane-dense flatten: (B, S, D) -> (B, S*D); free (row-major bitcast).
    x2 = x.reshape(B, L)
    pos2 = pos_embedding.reshape(1, L)

    TB, TL = _pick_tiles(B, L, itemsize, target_block_bytes)
    num_l = L // TL
    num_b = B // TB

    grid_spec = pltpu.PrefetchScalarGridSpec(
        num_scalar_prefetch=0,
        # Lane-chunk axis OUTER, batch-chunk axis INNER: the pos block index
        # (0, l) is constant across the inner loop -> pos tile stays resident.
        grid=(num_l, num_b),
        in_specs=[
            pl.BlockSpec((TB, TL), lambda l, b: (b, l)),   # x
            pl.BlockSpec((1, TL), lambda l, b: (0, l)),    # pos (batch-broadcast)
        ],
        out_specs=pl.BlockSpec((TB, TL), lambda l, b: (b, l)),
    )

    cost = pl.CostEstimate(
        flops=B * L,
        transcendentals=0,
        bytes_accessed=(2 * B * L + L) * itemsize,
    )

    out2 = pl.pallas_call(
        _pos_emb_kernel,
        out_shape=jax.ShapeDtypeStruct((B, L), x.dtype),
        grid_spec=grid_spec,
        compiler_params=pltpu.CompilerParams(
            dimension_semantics=("parallel", "parallel"),
        ),
        cost_estimate=cost,
        # The add is in-place-safe: alias x to the output (no extra HBM alloc
        # when x is donated at the JIT boundary).
        input_output_aliases={0: 0},
    )(x2, pos2)

    return out2.reshape(B, S, D)


def _check(x, pos, **kw):
    out = jax.block_until_ready(positional_embedding_1d(x, pos, **kw))
    ref = x + pos
    assert out.shape == x.shape and out.dtype == x.dtype
    assert jnp.allclose(out.astype(jnp.float32), ref.astype(jnp.float32),
                        atol=1e-5, rtol=1e-5)


if __name__ == "__main__":
    key = jax.random.PRNGKey(0)

    # 1) Small shape matching the module spec (batch=2, seq=8, hidden=32).
    k1, k2, k3, k4 = jax.random.split(key, 4)
    B, S, D = 2, 8, 32
    x = jax.random.normal(k1, (B, S, D), dtype=jnp.float32)
    # nn.Parameter is zero-initialized in the module; use small non-zero values
    # so the addition is actually exercised.
    pos = 0.02 * jax.random.normal(k2, (1, S, D), dtype=jnp.float32)
    _check(x, pos)

    # 2) Shape that exercises multi-step tiling on both grid axes (lane tiling
    #    + batch tiling + resident pos block), with a tiny block budget so the
    #    grid has several steps even at this small size.
    B2, S2, D2 = 16, 64, 128
    x2 = jax.random.normal(k3, (B2, S2, D2), dtype=jnp.float32)
    pos2 = 0.02 * jax.random.normal(k4, (1, S2, D2), dtype=jnp.float32)
    _check(x2, pos2, target_block_bytes=64 * 1024)

    print("KERNEL_OK")
</pallas_src>

<mosaic_0001>
module attributes {stable_mosaic.version = 11 : i64} {
  func.func @_pos_emb_kernel(%arg0: i32, %arg1: i32, %arg2: memref<2x256xf32, #tpu.memory_space<vmem>>, %arg3: memref<1x256xf32, #tpu.memory_space<vmem>>, %arg4: memref<2x256xf32, #tpu.memory_space<vmem>>) attributes {dimension_semantics = [#tpu.dimension_semantics<parallel>, #tpu.dimension_semantics<parallel>], iteration_bounds = array<i64: 1, 1>, scalar_prefetch = 0 : i64, scratch_operands = 0 : i64, tpu.core_type = #tpu.core_type<tc>, window_params = [{transform_indices = @transform_0, window_bounds = array<i64: 2, 256>}, {transform_indices = @transform_1, window_bounds = array<i64: 1, 256>}, {transform_indices = @transform_2, window_bounds = array<i64: 2, 256>}]} {
    %c0 = arith.constant 0 : index
    %c0_0 = arith.constant 0 : index
    %0 = vector.load %arg2[%c0, %c0_0] : memref<2x256xf32, #tpu.memory_space<vmem>>, vector<2x256xf32>
    %c0_1 = arith.constant 0 : index
    %c0_2 = arith.constant 0 : index
    %1 = vector.load %arg3[%c0_1, %c0_2] : memref<1x256xf32, #tpu.memory_space<vmem>>, vector<1x256xf32>
    %2 = vector.broadcast %1 : vector<1x256xf32> to vector<2x256xf32>
    %3 = arith.addf %0, %2 : vector<2x256xf32>
    %c0_3 = arith.constant 0 : index
    %c0_4 = arith.constant 0 : index
    %4 = vector.load %arg4[%c0_3, %c0_4] : memref<2x256xf32, #tpu.memory_space<vmem>>, vector<2x256xf32>
    tpu.vector_store %arg4[%c0_3, %c0_4], %3 {strides = array<i32>} : memref<2x256xf32, #tpu.memory_space<vmem>>, vector<2x256xf32>,
    return
  }
  func.func @transform_0(%arg0: i32, %arg1: i32) -> (i32, i32) {
    %c0_i32 = arith.constant 0 : i32
    return %arg1, %arg0 : i32, i32
  }
  func.func @transform_1(%arg0: i32, %arg1: i32) -> (i32, i32) {
    %c0_i32 = arith.constant 0 : i32
    %c0_i32_0 = arith.constant 0 : i32
    return %c0_i32, %arg0 : i32, i32
  }
  func.func @transform_2(%arg0: i32, %arg1: i32) -> (i32, i32) {
    %c0_i32 = arith.constant 0 : i32
    return %arg1, %arg0 : i32, i32
  }
}

</mosaic_0001>

<llo_original>
// kernel: tpu_custom_call.1
$region0: #{tpu_custom_call.1}
  #allocation0 [shape = 'u32[]', space=smem, size = 0x4, offset = 0x4, fixed_abs, tag = 'smem constant byte address 0x4 - core index']
  #allocation1 [shape = 'u32[72,128]{1,0:T(1,128)}', space=vmem, size = 0x9000, scoped, tag = 'internal scratch']
  %s0 = inlined_call_operand.hbm [shape: f32[2,256], index: 0, kind: input, shape index: {}, may-alias: {0,2}]
  %s1 = inlined_call_operand.vmem [shape: f32[1,256], index: 1, kind: input, shape index: {}]
  %s2 = inlined_call_operand.hbm [shape: f32[2,256], index: 2, kind: output, shape index: {}, may-alias: {0,2}]
  %s3 = sld [smem:[#allocation0]]
  $region22: #{tpu_custom_call.1} parent=0
    _
  %s5 = ssub.s32 1, %s3
  %s6 = scalar_select 0, %s5, %s3
  $region1: #{tpu_custom_call.1} parent=0
    #allocation2 [shape = 'u8[2048]{0}', space=vmem, size = 0x800, scoped, tag = 'input window, operand 0, single buffered']
    #allocation3 [shape = 's32[1]{0}', space=sflag, size = 0x4, scoped, tag = 'scoped memory for tpu_custom_call.1']
    #allocation4 [shape = 's32[1]{0}', space=sflag, size = 0x4, scoped, tag = 'scoped memory for tpu_custom_call.1']
    #allocation5 [shape = 'u8[2048]{0}', space=vmem, size = 0x800, scoped, tag = 'output window, operand 0, single buffered']
    %7 = vsyncpa [#allocation3], 0
    %8 = vsyncpa [#allocation4], 0
    // Predicated region
    $region2: #{tpu_custom_call.1} parent=1 // pred_check
      _
    $region3: #{tpu_custom_call.1} parent=1 // pred_check_branch
      %10 = sbr.rel (0) target = $region5
    $region4: #{tpu_custom_call.1} parent=1 // pred_region
      %12 = vsyncadd [#allocation3], 0
      %s14 = sshll.u32 %s0, 4
      %s15 = int_to_ptr.hbm [resolvable:$true] %s14
      %s16 = sshll.u32 [#allocation2], 4
      %s17 = int_to_ptr.vmem [resolvable:$true] %s16
      %19 = dma.hbm_to_vmem [thread:$0]  %s15, 64, %s17, [#allocation3]
    $region5: #{tpu_custom_call.1} parent=1 // pred_fallthru
      _
    // Predicated region
    $region6: #{tpu_custom_call.1} parent=1 // pred_check
      _
    $region7: #{tpu_custom_call.1} parent=1 // pred_check_branch
      %21 = sbr.rel (0) target = $region9
    $region8: #{tpu_custom_call.1} parent=1 // pred_region
      _
    $region9: #{tpu_custom_call.1} parent=1 // pred_fallthru
      _
    // Predicated region
    $region10: #{tpu_custom_call.1} parent=1 // pred_check
      _
    $region11: #{tpu_custom_call.1} parent=1 // pred_check_branch
      %23 = sbr.rel (0) target = $region13
    $region12: #{tpu_custom_call.1} parent=1 // pred_region
      %25 = dma.done [#allocation3], 64
    $region13: #{tpu_custom_call.1} parent=1 // pred_fallthru
      _
    %v26 = vld [vmem:[#allocation2] sm:$0xf]
    %v27 = vld [vmem:[%s1] sm:$0x3]
    %v29 = vperm.slane %v27, 0
    %v30 = vperm.slane %v27, 1
    %v31 = vrot.slane %v30, 6
    %vm32 = vcmask 1041408
    %v33 = vsel %vm32, %v29, %v31
    %v35 = vadd.f32 %v26, %v33
    %36 = vst [vmem:[#allocation5] sm:$0xf] %v35
    // Predicated region
    $region14: #{tpu_custom_call.1} parent=1 // pred_check
      _
    $region15: #{tpu_custom_call.1} parent=1 // pred_check_branch
      %38 = sbr.rel (0) target = $region17
    $region16: #{tpu_custom_call.1} parent=1 // pred_region
      %40 = vsyncadd [#allocation4], 0
      %s42 = sshll.u32 [#allocation5], 4
      %s43 = int_to_ptr.vmem [resolvable:$true] %s42
      %s44 = sshll.u32 %s2, 4
      %s45 = int_to_ptr.hbm [resolvable:$true] %s44
      %47 = dma.vmem_to_hbm [thread:$0]  %s43, 64, %s45, [#allocation4]
    $region17: #{tpu_custom_call.1} parent=1 // pred_fallthru
      _
    // Predicated region
    $region18: #{tpu_custom_call.1} parent=1 // pred_check
      _
    $region19: #{tpu_custom_call.1} parent=1 // pred_check_branch
      %49 = sbr.rel (0) target = $region21
    $region20: #{tpu_custom_call.1} parent=1 // pred_region
      %51 = dma.done [#allocation4], 64
    $region21: #{tpu_custom_call.1} parent=1 // pred_fallthru
      _
    %52 = vsyncpa [#allocation3], 1
    %53 = vsyncpa [#allocation4], 1

</llo_original>
